<compile_context>
chip_gen: v7x
topology: tpu7x:2x2x1
jax: 0.10.0
libtpu: 0.0.40
codegen_flags: <defaults>
</compile_context>

<pallas_src>
import functools

import jax
import jax.numpy as jnp
from jax.experimental import pallas as pl
from jax.experimental.pallas import tpu as pltpu


def _round_up(x, m):
    return ((x + m - 1) // m) * m


def _vmem_capacity_bytes():
    """Physical VMEM of the local TPU generation (fallback: v7x's 64 MiB)."""
    try:
        cap = getattr(pltpu.get_tpu_info(), "vmem_capacity_bytes", None)
        if cap:
            return int(cap)
    except Exception:
        pass
    return 64 * 1024 * 1024


def _dice_partial_kernel(x_ref, t_ref, inter_ref, denom_ref, *,
                         hw, tiles_per_split, needs_mask):
    """Accumulate per-(batch, split, class) partial dice sums.

    x_ref:     (1, C, T) prediction slab for (batch, spatial tile).
    t_ref:     (1, 1, T) int32 class ids for the same tile.
    inter_ref: (1, C, 128) resident output: lane-wide sum of pred*onehot.
    denom_ref: (1, C, 128) resident output: lane-wide sum of pred + onehot.
    Cross-lane reduction and the divide happen in the JAX epilogue.
    """
    p = pl.program_id(1)   # spatial split (parallel)
    s = pl.program_id(2)   # spatial tile within split (reduction, innermost)

    @pl.when(s == 0)
    def _():
        inter_ref[...] = jnp.zeros_like(inter_ref)
        denom_ref[...] = jnp.zeros_like(denom_ref)

    c = x_ref.shape[1]
    t_tile = x_ref.shape[2]
    num_chunks = t_tile // 128

    # Class ids as a (C, 1) column -> broadcast against the (1, 128) target row
    # (no full (C, T) iota regenerated every step).
    class_col = jax.lax.broadcasted_iota(jnp.int32, (c, 1), 0)
    if needs_mask:
        lane_iota = jax.lax.broadcasted_iota(jnp.int32, (1, 128), 1)
        # Global column of lane 0 of this tile (unclamped; phantom tiles >= hw).
        base_col = (p * tiles_per_split + s) * t_tile

    # For modest class counts keep the running sums in vregs and touch the
    # resident output block only once per grid step; for large C accumulate
    # straight into VMEM to bound register pressure.
    acc_in_vregs = c <= 64
    if acc_in_vregs:
        inter = jnp.zeros((c, 128), jnp.float32)
        denom = jnp.zeros((c, 128), jnp.float32)

    for j in range(num_chunks):                      # unrolled at trace time
        off = j * 128
        x_j = x_ref[0, :, pl.ds(off, 128)].astype(jnp.float32)   # (C, 128)
        t_j = t_ref[0, :, pl.ds(off, 128)]                       # (1, 128) int32
        if needs_mask:
            valid = (base_col + off + lane_iota) < hw            # (1, 128) bool
            x_j = jnp.where(valid, x_j, 0.0)
            t_j = jnp.where(valid, t_j, jnp.int32(-1))           # matches no class
        cmask = t_j == class_col                                 # (C, 128) broadcast
        inter_c = jnp.where(cmask, x_j, 0.0)                     # pred * onehot
        denom_c = jnp.where(cmask, x_j + 1.0, x_j)               # pred + onehot
        if acc_in_vregs:
            inter = inter + inter_c
            denom = denom + denom_c
        else:
            inter_ref[0] += inter_c
            denom_ref[0] += denom_c

    if acc_in_vregs:
        inter_ref[0] += inter
        denom_ref[0] += denom


def multiclass_dice_loss(pred, target, ignore_labels=None, *, t_tile_cap=8192):
    """pred: [N, C, H, W] float; target: [N, 1, H, W] int class indices."""
    n, num_classes, h, w = pred.shape
    assert target.shape == (n, 1, h, w)

    target = target.astype(jnp.int32)
    if ignore_labels is not None:
        # Remap ignored labels to ids >= num_classes so they match no class
        # channel used in the loss (same effect as the PyTorch relabel+scatter).
        for i, lbl in enumerate(ignore_labels):
            target = jnp.where(target == lbl, num_classes + i, target)

    hw = h * w
    pred_flat = pred.reshape(n, num_classes, hw)
    target_flat = target.reshape(n, 1, hw)

    # --- spatial tiling: lane-dense tiles (multiple of 128 columns), sized from
    #     the local generation's VMEM so double-buffered inputs always fit.
    itemsize = jnp.dtype(pred.dtype).itemsize
    bytes_per_col = 2 * (num_classes * itemsize + 4)        # x2 = double buffer
    vmem_cap = _vmem_capacity_bytes()
    in_budget = min(max(vmem_cap // 4, 4 << 20), 24 << 20)  # ~16 MiB v7x, 24 MiB v5e/v6e
    cap = max(128, (int(t_tile_cap) // 128) * 128)          # also bounds unroll depth
    max_tile = max(128, (in_budget // bytes_per_col) // 128 * 128)
    t_tile = min(_round_up(hw, 128), max_tile, cap)

    total_tiles = -(-hw // t_tile)
    # Split the spatial sweep into two independent halves so both v7x
    # TensorCores get work even at N == 1; halves combine in the epilogue.
    n_split = 2 if total_tiles >= 2 else 1
    tiles_per_split = -(-total_tiles // n_split)
    has_phantom = n_split * tiles_per_split != total_tiles
    needs_mask = (hw % t_tile != 0) or has_phantom
    last_tile = total_tiles - 1

    def in_tile_map(b, p, s):
        t_idx = p * tiles_per_split + s
        # Clamp phantom tiles onto the last real tile (their lanes are masked
        # to zero inside the kernel) so no DMA ever goes out of bounds.
        return (b, 0, jnp.minimum(t_idx, last_tile))

    def out_map(b, p, s):
        return (b * n_split + p, 0, 0)

    kernel = functools.partial(
        _dice_partial_kernel, hw=hw,
        tiles_per_split=tiles_per_split, needs_mask=needs_mask)

    vmem_limit = int(min(max(vmem_cap // 2, 16 << 20),
                         max(16 << 20, t_tile * bytes_per_col + (8 << 20))))

    inter_out, denom_out = pl.pallas_call(
        kernel,
        out_shape=(
            jax.ShapeDtypeStruct((n * n_split, num_classes, 128), jnp.float32),
            jax.ShapeDtypeStruct((n * n_split, num_classes, 128), jnp.float32),
        ),
        grid_spec=pltpu.PrefetchScalarGridSpec(
            num_scalar_prefetch=0,
            grid=(n, n_split, tiles_per_split),   # batch/split parallel, tiles inner
            in_specs=[
                pl.BlockSpec((1, num_classes, t_tile), in_tile_map),
                pl.BlockSpec((1, 1, t_tile), in_tile_map),
            ],
            out_specs=[
                pl.BlockSpec((1, num_classes, 128), out_map),
                pl.BlockSpec((1, num_classes, 128), out_map),
            ],
        ),
        compiler_params=pltpu.CompilerParams(
            dimension_semantics=("parallel", "parallel", "arbitrary"),
            vmem_limit_bytes=vmem_limit),
    )(pred_flat, target_flat)

    smooth = jnp.float32(1.0)
    inter = inter_out.reshape(n, n_split, num_classes, 128).sum(axis=(1, 3))
    denom = denom_out.reshape(n, n_split, num_classes, 128).sum(axis=(1, 3))
    ratio = 2.0 * (inter + smooth) / (denom + smooth)            # (N, C)
    # totalLoss = sum_c (1 - mean_b ratio_bc) = C - sum(ratio) / N
    return jnp.float32(num_classes) - jnp.sum(ratio) / jnp.float32(n)


def _reference_multiclass_dice_loss(pred, target, ignore_labels=None):
    """Pure-JAX reference mirroring the PyTorch module (for validation)."""
    n, num_classes, h, w = pred.shape
    target = target.astype(jnp.int32)
    if ignore_labels is not None:
        for i, lbl in enumerate(ignore_labels):
            target = jnp.where(target == lbl, num_classes + i, target)
    smooth = 1.0
    total = jnp.float32(0.0)
    for c in range(num_classes):
        x = pred[:, c].reshape(n, -1).astype(jnp.float32)
        oh = (target[:, 0].reshape(n, -1) == c).astype(jnp.float32)
        inter = jnp.sum(x * oh, axis=1)
        ratio = 2.0 * (inter + smooth) / (jnp.sum(x, axis=1)
                                          + jnp.sum(oh, axis=1) + smooth)
        total = total + (1.0 - jnp.sum(ratio) / n)
    return total


if __name__ == "__main__":
    root = jax.random.PRNGKey(0)

    def run_case(key, n, c, h, w, ignore_labels=None, t_tile_cap=8192):
        k_pred, k_tgt = jax.random.split(key)
        logits = jax.random.normal(k_pred, (n, c, h, w), dtype=jnp.float32)
        pred = jax.nn.softmax(logits, axis=1)          # soft per-pixel class scores
        target = jax.random.randint(k_tgt, (n, 1, h, w), 0, c, dtype=jnp.int32)
        loss = jax.block_until_ready(
            multiclass_dice_loss(pred, target, ignore_labels, t_tile_cap=t_tile_cap))
        ref = jax.block_until_ready(
            _reference_multiclass_dice_loss(pred, target, ignore_labels))
        assert jnp.allclose(loss, ref, rtol=1e-4, atol=1e-5), (n, c, h, w, loss, ref)

    keys = jax.random.split(root, 4)
    run_case(keys[0], 2, 4, 16, 16)                      # canonical small shape
    run_case(keys[1], 1, 3, 23, 29)                      # ragged hw, single tile
    run_case(keys[2], 2, 4, 35, 20, t_tile_cap=256)      # multi-tile + split + phantom tile
    run_case(keys[3], 2, 4, 16, 16, ignore_labels=[2])   # ignore-labels remap path
    print("KERNEL_OK")
</pallas_src>

<mosaic_0001>
module attributes {stable_mosaic.version = 11 : i64} {
  func.func @_dice_partial_kernel(%arg0: i32, %arg1: i32, %arg2: i32, %arg3: memref<1x4x256xf32, #tpu.memory_space<vmem>>, %arg4: memref<1x1x256xi32, #tpu.memory_space<vmem>>, %arg5: memref<1x4x128xf32, #tpu.memory_space<vmem>>, %arg6: memref<1x4x128xf32, #tpu.memory_space<vmem>>) attributes {dimension_semantics = [#tpu.dimension_semantics<parallel>, #tpu.dimension_semantics<parallel>, #tpu.dimension_semantics<arbitrary>], iteration_bounds = array<i64: 2, 1, 1>, scalar_prefetch = 0 : i64, scratch_operands = 0 : i64, tpu.core_type = #tpu.core_type<tc>, window_params = [{transform_indices = @transform_0, window_bounds = array<i64: 1, 4, 256>}, {transform_indices = @transform_1, window_bounds = array<i64: 1, 1, 256>}, {transform_indices = @transform_2, window_bounds = array<i64: 1, 4, 128>}, {transform_indices = @transform_3, window_bounds = array<i64: 1, 4, 128>}]} {
    %c0_i32 = arith.constant 0 : i32
    %0 = arith.cmpi eq, %arg2, %c0_i32 : i32
    %1 = arith.extui %0 : i1 to i32
    %c0_i32_0 = arith.constant 0 : i32
    %2 = arith.cmpi ne, %1, %c0_i32_0 : i32
    scf.if %2 {
      %cst_28 = arith.constant 0.000000e+00 : f32
      %46 = vector.broadcast %cst_28 : f32 to vector<1x4x128xf32>
      %c0_29 = arith.constant 0 : index
      %c0_30 = arith.constant 0 : index
      %c0_31 = arith.constant 0 : index
      %47 = vector.load %arg5[%c0_29, %c0_30, %c0_31] : memref<1x4x128xf32, #tpu.memory_space<vmem>>, vector<1x4x128xf32>
      tpu.vector_store %arg5[%c0_29, %c0_30, %c0_31], %46 {strides = array<i32>} : memref<1x4x128xf32, #tpu.memory_space<vmem>>, vector<1x4x128xf32>,
      %cst_32 = arith.constant 0.000000e+00 : f32
      %48 = vector.broadcast %cst_32 : f32 to vector<1x4x128xf32>
      %c0_33 = arith.constant 0 : index
      %c0_34 = arith.constant 0 : index
      %c0_35 = arith.constant 0 : index
      %49 = vector.load %arg6[%c0_33, %c0_34, %c0_35] : memref<1x4x128xf32, #tpu.memory_space<vmem>>, vector<1x4x128xf32>
      tpu.vector_store %arg6[%c0_33, %c0_34, %c0_35], %48 {strides = array<i32>} : memref<1x4x128xf32, #tpu.memory_space<vmem>>, vector<1x4x128xf32>,
    } else {
    }
    %3 = tpu.iota {dimensions = array<i32: 0>} : vector<4x1xi32>
    %cst = arith.constant 0.000000e+00 : f32
    %4 = vector.broadcast %cst : f32 to vector<4x128xf32>
    %cst_1 = arith.constant 0.000000e+00 : f32
    %5 = vector.broadcast %cst_1 : f32 to vector<4x128xf32>
    %c0 = arith.constant 0 : index
    %c0_2 = arith.constant 0 : index
    %c0_3 = arith.constant 0 : index
    %6 = vector.load %arg3[%c0, %c0_2, %c0_3] : memref<1x4x256xf32, #tpu.memory_space<vmem>>, vector<1x4x128xf32>
    %7 = vector.shape_cast %6 : vector<1x4x128xf32> to vector<4x128xf32>
    %c0_4 = arith.constant 0 : index
    %c0_5 = arith.constant 0 : index
    %c0_6 = arith.constant 0 : index
    %8 = vector.load %arg4[%c0_4, %c0_5, %c0_6] : memref<1x1x256xi32, #tpu.memory_space<vmem>>, vector<1x1x128xi32>
    %9 = vector.shape_cast %8 : vector<1x1x128xi32> to vector<1x128xi32>
    %10 = vector.broadcast %9 : vector<1x128xi32> to vector<4x128xi32>
    %11 = vector.broadcast %3 : vector<4x1xi32> to vector<4x128xi32>
    %12 = arith.cmpi eq, %10, %11 : vector<4x128xi32>
    %cst_7 = arith.constant 0.000000e+00 : f32
    %13 = vector.broadcast %cst_7 : f32 to vector<4x128xf32>
    %14 = arith.select %12, %7, %13 : vector<4x128xi1>, vector<4x128xf32>
    %cst_8 = arith.constant 1.000000e+00 : f32
    %15 = vector.broadcast %cst_8 : f32 to vector<4x128xf32>
    %16 = arith.addf %7, %15 : vector<4x128xf32>
    %17 = arith.select %12, %16, %7 : vector<4x128xi1>, vector<4x128xf32>
    %18 = arith.addf %4, %14 : vector<4x128xf32>
    %19 = arith.addf %5, %17 : vector<4x128xf32>
    %c0_9 = arith.constant 0 : index
    %c0_10 = arith.constant 0 : index
    %c128 = arith.constant 128 : index
    %20 = vector.load %arg3[%c0_9, %c0_10, %c128] : memref<1x4x256xf32, #tpu.memory_space<vmem>>, vector<1x4x128xf32>
    %21 = vector.shape_cast %20 : vector<1x4x128xf32> to vector<4x128xf32>
    %c0_11 = arith.constant 0 : index
    %c0_12 = arith.constant 0 : index
    %c128_13 = arith.constant 128 : index
    %22 = vector.load %arg4[%c0_11, %c0_12, %c128_13] : memref<1x1x256xi32, #tpu.memory_space<vmem>>, vector<1x1x128xi32>
    %23 = vector.shape_cast %22 : vector<1x1x128xi32> to vector<1x128xi32>
    %24 = vector.broadcast %23 : vector<1x128xi32> to vector<4x128xi32>
    %25 = vector.broadcast %3 : vector<4x1xi32> to vector<4x128xi32>
    %26 = arith.cmpi eq, %24, %25 : vector<4x128xi32>
    %cst_14 = arith.constant 0.000000e+00 : f32
    %27 = vector.broadcast %cst_14 : f32 to vector<4x128xf32>
    %28 = arith.select %26, %21, %27 : vector<4x128xi1>, vector<4x128xf32>
    %cst_15 = arith.constant 1.000000e+00 : f32
    %29 = vector.broadcast %cst_15 : f32 to vector<4x128xf32>
    %30 = arith.addf %21, %29 : vector<4x128xf32>
    %31 = arith.select %26, %30, %21 : vector<4x128xi1>, vector<4x128xf32>
    %32 = arith.addf %18, %28 : vector<4x128xf32>
    %33 = arith.addf %19, %31 : vector<4x128xf32>
    %c0_16 = arith.constant 0 : index
    %c0_17 = arith.constant 0 : index
    %c0_18 = arith.constant 0 : index
    %34 = vector.load %arg5[%c0_16, %c0_17, %c0_18] : memref<1x4x128xf32, #tpu.memory_space<vmem>>, vector<1x4x128xf32>
    %35 = vector.shape_cast %34 : vector<1x4x128xf32> to vector<4x128xf32>
    %36 = arith.addf %35, %32 : vector<4x128xf32>
    %c0_19 = arith.constant 0 : index
    %c0_20 = arith.constant 0 : index
    %c0_21 = arith.constant 0 : index
    %37 = vector.load %arg5[%c0_19, %c0_20, %c0_21] : memref<1x4x128xf32, #tpu.memory_space<vmem>>, vector<1x4x128xf32>
    %38 = vector.shape_cast %37 : vector<1x4x128xf32> to vector<4x128xf32>
    %39 = vector.shape_cast %36 : vector<4x128xf32> to vector<1x4x128xf32>
    tpu.vector_store %arg5[%c0_19, %c0_20, %c0_21], %39 {strides = array<i32>} : memref<1x4x128xf32, #tpu.memory_space<vmem>>, vector<1x4x128xf32>,
    %c0_22 = arith.constant 0 : index
    %c0_23 = arith.constant 0 : index
    %c0_24 = arith.constant 0 : index
    %40 = vector.load %arg6[%c0_22, %c0_23, %c0_24] : memref<1x4x128xf32, #tpu.memory_space<vmem>>, vector<1x4x128xf32>
    %41 = vector.shape_cast %40 : vector<1x4x128xf32> to vector<4x128xf32>
    %42 = arith.addf %41, %33 : vector<4x128xf32>
    %c0_25 = arith.constant 0 : index
    %c0_26 = arith.constant 0 : index
    %c0_27 = arith.constant 0 : index
    %43 = vector.load %arg6[%c0_25, %c0_26, %c0_27] : memref<1x4x128xf32, #tpu.memory_space<vmem>>, vector<1x4x128xf32>
    %44 = vector.shape_cast %43 : vector<1x4x128xf32> to vector<4x128xf32>
    %45 = vector.shape_cast %42 : vector<4x128xf32> to vector<1x4x128xf32>
    tpu.vector_store %arg6[%c0_25, %c0_26, %c0_27], %45 {strides = array<i32>} : memref<1x4x128xf32, #tpu.memory_space<vmem>>, vector<1x4x128xf32>,
    return
  }
  func.func @transform_0(%arg0: i32, %arg1: i32, %arg2: i32) -> (i32, i32, i32) {
    %c1_i32 = arith.constant 1 : i32
    %0 = arith.muli %arg1, %c1_i32 : i32
    %1 = arith.addi %0, %arg2 : i32
    %c0_i32 = arith.constant 0 : i32
    %2 = arith.minsi %1, %c0_i32 : i32
    %c0_i32_0 = arith.constant 0 : i32
    %c0_i32_1 = arith.constant 0 : i32
    return %arg0, %c0_i32_0, %2 : i32, i32, i32
  }
  func.func @transform_1(%arg0: i32, %arg1: i32, %arg2: i32) -> (i32, i32, i32) {
    %c1_i32 = arith.constant 1 : i32
    %0 = arith.muli %arg1, %c1_i32 : i32
    %1 = arith.addi %0, %arg2 : i32
    %c0_i32 = arith.constant 0 : i32
    %2 = arith.minsi %1, %c0_i32 : i32
    %c0_i32_0 = arith.constant 0 : i32
    %c0_i32_1 = arith.constant 0 : i32
    return %arg0, %c0_i32_0, %2 : i32, i32, i32
  }
  func.func @transform_2(%arg0: i32, %arg1: i32, %arg2: i32) -> (i32, i32, i32) {
    %c1_i32 = arith.constant 1 : i32
    %0 = arith.muli %arg0, %c1_i32 : i32
    %1 = arith.addi %0, %arg1 : i32
    %c0_i32 = arith.constant 0 : i32
    %c0_i32_0 = arith.constant 0 : i32
    %c0_i32_1 = arith.constant 0 : i32
    return %1, %c0_i32, %c0_i32_0 : i32, i32, i32
  }
  func.func @transform_3(%arg0: i32, %arg1: i32, %arg2: i32) -> (i32, i32, i32) {
    %c1_i32 = arith.constant 1 : i32
    %0 = arith.muli %arg0, %c1_i32 : i32
    %1 = arith.addi %0, %arg1 : i32
    %c0_i32 = arith.constant 0 : i32
    %c0_i32_0 = arith.constant 0 : i32
    %c0_i32_1 = arith.constant 0 : i32
    return %1, %c0_i32, %c0_i32_0 : i32, i32, i32
  }
}

</mosaic_0001>

<llo_original>
// kernel: tpu_custom_call.1
$region0: #{tpu_custom_call.1}
  #allocation0 [shape = 'u32[]', space=smem, size = 0x4, offset = 0x4, fixed_abs, tag = 'smem constant byte address 0x4 - core index']
  #allocation1 [shape = 'u32[144,128]{1,0:T(1,128)}', space=vmem, size = 0x12000, scoped, tag = 'internal scratch']
  %s0 = inlined_call_operand.hbm [shape: f32[2,4,256], index: 0, kind: input, shape index: {}]
  %s1 = inlined_call_operand.hbm [shape: s32[2,1,256], index: 1, kind: input, shape index: {}]
  %s2 = inlined_call_operand.hbm [shape: f32[2,4,128], index: 2, kind: output, shape index: {0}]
  %s3 = inlined_call_operand.hbm [shape: f32[2,4,128], index: 3, kind: output, shape index: {1}]
  %4 = xla_tuple %s2, %s3
  %s5 = sld [smem:[#allocation0]]
  $region61: #{tpu_custom_call.1} parent=0
    _
  %s7 = ssub.s32 1, %s5
  %s8 = scalar_select 0, %s7, %s5
  $region1: #{tpu_custom_call.1} parent=0
    #allocation2 [shape = 'u8[8192]{0}', space=vmem, size = 0x2000, scoped, tag = 'input window, operand 0']
    #allocation3 [shape = 's32[2]{0}', space=sflag, size = 0x8, scoped, tag = 'scoped memory for tpu_custom_call.1']
    #allocation4 [shape = 's32[2]{0}', space=sflag, size = 0x8, scoped, tag = 'scoped memory for tpu_custom_call.1']
    #allocation5 [shape = 'u8[2048]{0}', space=vmem, size = 0x800, scoped, tag = 'input window, operand 1']
    #allocation6 [shape = 's32[2]{0}', space=sflag, size = 0x8, scoped, tag = 'scoped memory for tpu_custom_call.1']
    #allocation7 [shape = 'u8[4096]{0}', space=vmem, size = 0x1000, scoped, tag = 'output window, operand 0']
    #allocation8 [shape = 'u8[4096]{0}', space=vmem, size = 0x1000, scoped, tag = 'output window, operand 1']
    #allocation9 [shape = 's32[2]{0}', space=sflag, size = 0x8, scoped, tag = 'scoped memory for tpu_custom_call.1']
    %9 = vsyncpa [#allocation3], 0
    %s10 = scalar_lea.sflag [#allocation3], 1
    %11 = vsyncpa %s10, 0
    %12 = vsyncpa [#allocation6], 0
    %s13 = scalar_lea.sflag [#allocation6], 1
    %14 = vsyncpa %s13, 0
    %15 = vsyncpa [#allocation4], 0
    %s16 = scalar_lea.sflag [#allocation4], 1
    %17 = vsyncpa %s16, 0
    %18 = vsyncpa [#allocation9], 0
    %s19 = scalar_lea.sflag [#allocation9], 1
    %20 = vsyncpa %s19, 0
    loop: start=0, step=1, limit=4
    $region2: #{tpu_custom_call.1} parent=1 // loop_pre_header
      _
    $region3: #{tpu_custom_call.1} parent=1 // loop_header
      %s22 = sphi 0, %s26
      %p23 = scmp.ge.s32.totalorder %s22, 4
      %s29 = sphi 0, %s48
      %s30 = sphi 0, %s44
      %s31 = sphi 0, %s40
      %s32 = sphi 0, %s29
      %s33 = sphi 0, %s30
      %s34 = sphi 0, %s31
      %s35 = sphi 0, %s32
      %s36 = sphi 0, %s33
      %s37 = sphi 0, %s34
      %s59 = sphi 0, %s61
      %s62 = sphi 0, %s59
      %s63 = sphi 0, %s62
      %s79 = sphi 0, %s63
      %s93 = sphi 0, %s95
      %s96 = sphi 0, %s93
      %s97 = sphi 0, %s96
      %s113 = sphi 0, %s97
      %s121 = sphi 0, %s123
      %s124 = sphi 0, %s121
      %s125 = sphi 0, %s124
      %s141 = sphi 0, %s125
      %s149 = sphi 0, %s151
      %s152 = sphi 0, %s149
      %s153 = sphi 0, %s152
      %s169 = sphi 0, %s153
    $region4: #{tpu_custom_call.1} parent=1 // loop_header_branch
      %25 = sbr.rel (%p23) target = $region8
    $region5: #{tpu_custom_call.1} parent=1 // loop_body
      %s27 = ssub.s32 %s22, 1
      %s28 = ssub.s32 %s22, 2
      %s38 = sadd.s32 1, %s31
      %p39 = scmp.ge.s32.totalorder %s38, 1
      %s40 = scalar_select %p39, 0, %s38
      %s41 = sadd.s32 1, %s30
      %s42 = scalar_select %p39, %s41, %s30
      %p43 = scmp.ge.s32.totalorder %s42, 1
      %s44 = scalar_select %p43, 0, %s42
      %s45 = sadd.s32 1, %s29
      %s46 = scalar_select %p43, %s45, %s29
      %p47 = scmp.ge.s32.totalorder %s46, 2
      %s48 = scalar_select %p47, 0, %s46
      %s49 = sadd.s32 %s30, %s31
      %p50 = scmp.lt.s32.totalorder %s49, 0
      %s51 = scalar_select %p50, %s49, 0
      %s52 = sadd.s32 %s44, %s40
      %p53 = scmp.lt.s32.totalorder %s52, 0
      %s54 = scalar_select %p53, %s52, 0
      %s55 = ssub.s32 %s29, %s48
      %s56 = ssub.s32 %s51, %s54
      %s57 = sor.u32 %s55, %s56
      %p58 = scmp.eq.s32.totalorder %s57, 0
      %s60 = sadd.s32 %s59, 1
      %s61 = scalar_select %p58, %s59, %s60
      %p64 = pneg %p58
      %p65 = scmp.eq.s32.totalorder %s22, 1
      %p66 = por %p64, %p65
      %p67 = scmp.ne.s32.totalorder %s59, %s62
      %p68 = scmp.eq.s32.totalorder %s22, 0
      %p69 = por %p67, %p68
      %p70 = scmp.ne.s32.totalorder %s59, %s62
      %p71 = scmp.eq.s32.totalorder %s27, 1
      %p72 = por %p70, %p71
      %p73 = scmp.ne.s32.totalorder %s62, %s63
      %p74 = scmp.eq.s32.totalorder %s27, 0
      %p75 = por %p73, %p74
      %p76 = scmp.ne.s32.totalorder %s62, %s63
      %p77 = scmp.eq.s32.totalorder %s28, 1
      %p78 = por %p76, %p77
      %p80 = scmp.ne.s32.totalorder %s63, %s79
      %p81 = scmp.eq.s32.totalorder %s28, 0
      %p82 = por %p80, %p81
      %s83 = sadd.s32 %s30, %s31
      %p84 = scmp.lt.s32.totalorder %s83, 0
      %s85 = scalar_select %p84, %s83, 0
      %s86 = sadd.s32 %s44, %s40
      %p87 = scmp.lt.s32.totalorder %s86, 0
      %s88 = scalar_select %p87, %s86, 0
      %s89 = ssub.s32 %s29, %s48
      %s90 = ssub.s32 %s85, %s88
      %s91 = sor.u32 %s89, %s90
      %p92 = scmp.eq.s32.totalorder %s91, 0
      %s94 = sadd.s32 %s93, 1
      %s95 = scalar_select %p92, %s93, %s94
      %p98 = pneg %p92
      %p99 = scmp.eq.s32.totalorder %s22, 1
      %p100 = por %p98, %p99
      %p101 = scmp.ne.s32.totalorder %s93, %s96
      %p102 = scmp.eq.s32.totalorder %s22, 0
      %p103 = por %p101, %p102
      %p104 = scmp.ne.s32.totalorder %s93, %s96
      %p105 = scmp.eq.s32.totalorder %s27, 1
      %p106 = por %p104, %p105
      %p107 = scmp.ne.s32.totalorder %s96, %s97
      %p108 = scmp.eq.s32.totalorder %s27, 0
      %p109 = por %p107, %p108
      %p110 = scmp.ne.s32.totalorder %s96, %s97
      %p111 = scmp.eq.s32.totalorder %s28, 1
      %p112 = por %p110, %p111
      %p114 = scmp.ne.s32.totalorder %s97, %s113
      %p115 = scmp.eq.s32.totalorder %s28, 0
      %p116 = por %p114, %p115
      %s117 = sadd.s32 %s29, %s30
      %s118 = sadd.s32 %s48, %s44
      %s119 = ssub.s32 %s117, %s118
      %p120 = scmp.eq.s32.totalorder %s119, 0
      %s122 = sadd.s32 %s121, 1
      %s123 = scalar_select %p120, %s121, %s122
      %p126 = pneg %p120
      %p127 = scmp.eq.s32.totalorder %s22, 1
      %p128 = por %p126, %p127
      %p129 = scmp.ne.s32.totalorder %s121, %s124
      %p130 = scmp.eq.s32.totalorder %s22, 0
      %p131 = por %p129, %p130
      %p132 = scmp.ne.s32.totalorder %s121, %s124
      %p133 = scmp.eq.s32.totalorder %s27, 1
      %p134 = por %p132, %p133
      %p135 = scmp.ne.s32.totalorder %s124, %s125
      %p136 = scmp.eq.s32.totalorder %s27, 0
      %p137 = por %p135, %p136
      %p138 = scmp.ne.s32.totalorder %s124, %s125
      %p139 = scmp.eq.s32.totalorder %s28, 1
      %p140 = por %p138, %p139
      %p142 = scmp.ne.s32.totalorder %s125, %s141
      %p143 = scmp.eq.s32.totalorder %s28, 0
      %p144 = por %p142, %p143
      %s145 = sadd.s32 %s29, %s30
      %s146 = sadd.s32 %s48, %s44
      %s147 = ssub.s32 %s145, %s146
      %p148 = scmp.eq.s32.totalorder %s147, 0
      %s150 = sadd.s32 %s149, 1
      %s151 = scalar_select %p148, %s149, %s150
      %p154 = pneg %p148
      %p155 = scmp.eq.s32.totalorder %s22, 1
      %p156 = por %p154, %p155
      %p157 = scmp.ne.s32.totalorder %s149, %s152
      %p158 = scmp.eq.s32.totalorder %s22, 0
      %p159 = por %p157, %p158
      %p160 = scmp.ne.s32.totalorder %s149, %s152
      %p161 = scmp.eq.s32.totalorder %s27, 1
      %p162 = por %p160, %p161
      %p163 = scmp.ne.s32.totalorder %s152, %s153
      %p164 = scmp.eq.s32.totalorder %s27, 0
      %p165 = por %p163, %p164
      %p166 = scmp.ne.s32.totalorder %s152, %s153
      %p167 = scmp.eq.s32.totalorder %s28, 1
      %p168 = por %p166, %p167
      %p170 = scmp.ne.s32.totalorder %s153, %s169
      %p171 = scmp.eq.s32.totalorder %s28, 0
      %p172 = por %p170, %p171
      %p173 = scmp.le.s32.totalorder 1, %s22
      %p174 = scmp.lt.s32.totalorder %s22, 3
      %p175 = pnand %p173, %p174
      %p176 = pneg %p175
      // Predicated region
      $region9: #{tpu_custom_call.1} parent=5 // pred_check
        _
      $region10: #{tpu_custom_call.1} parent=5 // pred_check_branch
        %178 = sbr.rel (%p175) target = $region12
      $region11: #{tpu_custom_call.1} parent=5 // pred_region
        %s179 = ssub.s32 %s22, 1
      $region12: #{tpu_custom_call.1} parent=5 // pred_fallthru
        _
      %p180 = scmp.lt.s32.totalorder %s22, 2
      // Predicated region
      $region13: #{tpu_custom_call.1} parent=5 // pred_check
        %p181 = pneg %p180
      $region14: #{tpu_custom_call.1} parent=5 // pred_check_branch
        %183 = sbr.rel (%p181) target = $region16
      $region15: #{tpu_custom_call.1} parent=5 // pred_region
        // Predicated region
        $region17: #{tpu_custom_call.1} parent=15 // pred_check
          %p184 = pneg %p69
        $region18: #{tpu_custom_call.1} parent=15 // pred_check_branch
          %186 = sbr.rel (%p184) target = $region20
        $region19: #{tpu_custom_call.1} parent=15 // pred_region
          %s187 = sand.u32 %s59, 1
          %s188 = scalar_lea.sflag [#allocation3], %s187
          %s189 = sand.u32 %s59, 1
          %s190 = smul.addr %s189, 8
          %s191 = scalar_lea.vmem [#allocation2], %s190
          %s192 = sadd.s32 %s30, %s31
          %p193 = scmp.lt.s32.totalorder %s192, 0
          %s194 = scalar_select %p193, %s192, 0
          %s195 = smul.u32 2, %s194
          %s197 = ssub.s32 128, 128
          %198 = vsyncadd %s188, %s197
          %s199 = smul.addr %s29, 2
          %s200 = sadd.s32 %s195, %s199
          %s201 = smul.addr %s200, 64
          %s202 = scalar_lea.hbm %s0, %s201
          %s204 = sshll.u32 %s191, 4
          %s205 = int_to_ptr.vmem [resolvable:$true] %s204
          %207 = dma.hbm_to_vmem [thread:$0]  %s202, 128, %s205, %s188
        $region20: #{tpu_custom_call.1} parent=15 // pred_fallthru
          _
        // Predicated region
        $region21: #{tpu_custom_call.1} parent=15 // pred_check
          %p208 = pneg %p103
        $region22: #{tpu_custom_call.1} parent=15 // pred_check_branch
          %210 = sbr.rel (%p208) target = $region24
        $region23: #{tpu_custom_call.1} parent=15 // pred_region
          %s211 = sand.u32 %s93, 1
          %s212 = scalar_lea.sflag [#allocation6], %s211
          %s213 = sand.u32 %s93, 1
          %s214 = smul.addr %s213, 2
          %s215 = scalar_lea.vmem [#allocation5], %s214
          %s216 = sadd.s32 %s30, %s31
          %p217 = scmp.lt.s32.totalorder %s216, 0
          %s218 = scalar_select %p217, %s216, 0
          %s219 = smul.u32 2, %s218
          %s221 = ssub.s32 32, 32
          %222 = vsyncadd %s212, %s221
          %s223 = smul.addr %s29, 2
          %s224 = sadd.s32 %s219, %s223
          %s225 = smul.addr %s224, 16
          %s226 = scalar_lea.hbm %s1, %s225
          %s228 = sshll.u32 %s215, 4
          %s229 = int_to_ptr.vmem [resolvable:$true] %s228
          %231 = dma.hbm_to_vmem [thread:$0]  %s226, 32, %s229, %s212
        $region24: #{tpu_custom_call.1} parent=15 // pred_fallthru
          _
      $region16: #{tpu_custom_call.1} parent=5 // pred_fallthru
        _
      %p232 = scmp.le.s32.totalorder 1, %s22
      %p233 = scmp.lt.s32.totalorder %s22, 3
      %p234 = pnand %p232, %p233
      %p235 = pneg %p234
      // Predicated region
      $region25: #{tpu_custom_call.1} parent=5 // pred_check
        _
      $region26: #{tpu_custom_call.1} parent=5 // pred_check_branch
        %237 = sbr.rel (%p234) target = $region28
      $region27: #{tpu_custom_call.1} parent=5 // pred_region
        %s238 = ssub.s32 %s22, 1
        %s239 = sand.u32 %s62, 1
        %s240 = scalar_lea.sflag [#allocation3], %s239
        %s241 = sand.u32 %s62, 1
        %s242 = smul.addr %s241, 8
        %s243 = scalar_lea.vmem [#allocation2], %s242
        // Predicated region
        $region29: #{tpu_custom_call.1} parent=27 // pred_check
          %p244 = pneg %p75
        $region30: #{tpu_custom_call.1} parent=27 // pred_check_branch
          %246 = sbr.rel (%p244) target = $region32
        $region31: #{tpu_custom_call.1} parent=27 // pred_region
          %247 = dma.done %s240, 128
        $region32: #{tpu_custom_call.1} parent=27 // pred_fallthru
          _
        %s248 = sand.u32 %s96, 1
        %s249 = scalar_lea.sflag [#allocation6], %s248
        %s250 = sand.u32 %s96, 1
        %s251 = smul.addr %s250, 2
        %s252 = scalar_lea.vmem [#allocation5], %s251
        // Predicated region
        $region33: #{tpu_custom_call.1} parent=27 // pred_check
          %p253 = pneg %p109
        $region34: #{tpu_custom_call.1} parent=27 // pred_check_branch
          %255 = sbr.rel (%p253) target = $region36
        $region35: #{tpu_custom_call.1} parent=27 // pred_region
          %256 = dma.done %s249, 32
        $region36: #{tpu_custom_call.1} parent=27 // pred_fallthru
          _
        %s257 = sand.u32 %s62, 1
        %s258 = scalar_lea.sflag [#allocation3], %s257
        %s259 = sand.u32 %s62, 1
        %s260 = smul.addr %s259, 8
        %s261 = scalar_lea.vmem [#allocation2], %s260
        %p262 = pneg %p75
        %p263 = pneg %p72
        %s264 = sand.u32 %s96, 1
        %s265 = scalar_lea.sflag [#allocation6], %s264
        %s266 = sand.u32 %s96, 1
        %s267 = smul.addr %s266, 2
        %s268 = scalar_lea.vmem [#allocation5], %s267
        %p269 = pneg %p109
        %p270 = pneg %p106
        %p271 = pneg %p137
        %p272 = pneg %p134
        %s273 = sand.u32 %s124, 1
        %s274 = scalar_lea.sflag [#allocation4], %s273
        %s275 = sand.u32 %s124, 1
        %s276 = smul.addr %s275, 4
        %s277 = scalar_lea.vmem [#allocation7], %s276
        %p278 = pneg %p165
        %p279 = pneg %p162
        %s280 = sand.u32 %s152, 1
        %s281 = scalar_lea.sflag [#allocation9], %s280
        %s282 = sand.u32 %s152, 1
        %s283 = smul.addr %s282, 4
        %s284 = scalar_lea.vmem [#allocation8], %s283
        %s285 = sadd.s32 %s33, %s34
        %p286 = scmp.lt.s32.totalorder %s285, 0
        %s287 = scalar_select %p286, %s285, 0
        %s288 = smul.u32 2, %s287
        %s289 = sadd.s32 %s33, %s34
        %p290 = scmp.lt.s32.totalorder %s289, 0
        %s291 = scalar_select %p290, %s289, 0
        %s292 = smul.u32 2, %s291
        %s293 = sadd.s32 %s32, %s33
        %s294 = sadd.s32 %s32, %s33
        %p295 = scmp.eq.s32.totalorder %s34, 0
        // Predicated region
        $region37: #{tpu_custom_call.1} parent=27 // pred_check
          %p296 = pneg %p295
        $region38: #{tpu_custom_call.1} parent=27 // pred_check_branch
          %298 = sbr.rel (%p296) target = $region40
        $region39: #{tpu_custom_call.1} parent=27 // pred_region
          %299 = vst [vmem:[%s277] sm:$0xf] 0.0
          %300 = vst [vmem:[%s284] sm:$0xf] 0.0
        $region40: #{tpu_custom_call.1} parent=27 // pred_fallthru
          _
        %v301 = vlaneseq
        %v302 = vshrl.u32 %v301, 7
        %v303 = vld [vmem:[%s243] sm:$0xf]
        %v304 = vld [vmem:[%s252] sm:$0x1]
        %v305 = vlaneseq
        %v306 = vshrl.u32 %v305, 7
        %v307 = vsub.s32 0, %v306
        %v308 = vrot.slane %v304, %v307
        %vm309 = vcmp.eq.s32.totalorder %v308, %v302
        %v310 = vsel %vm309, %v303, 0.0
        %v311 = vadd.f32 %v303, 1.0
        %v312 = vsel %vm309, %v311, %v303
        %v313 = vadd.f32 %v310, 0.0
        %v314 = vadd.f32 %v312, 0.0
        %v315 = vld [vmem:[%s243 + $0x4] sm:$0xf]
        %v316 = vld [vmem:[%s252 + $0x1] sm:$0x1]
        %v317 = vlaneseq
        %v318 = vshrl.u32 %v317, 7
        %v319 = vsub.s32 0, %v318
        %v320 = vrot.slane %v316, %v319
        %vm321 = vcmp.eq.s32.totalorder %v320, %v302
        %v322 = vsel %vm321, %v315, 0.0
        %v323 = vadd.f32 %v315, 1.0
        %v324 = vsel %vm321, %v323, %v315
        %v325 = vadd.f32 %v313, %v322
        %v326 = vadd.f32 %v314, %v324
        %v327 = vld [vmem:[%s277] sm:$0xf]
        %v328 = vadd.f32 %v327, %v325
        %329 = vst [vmem:[%s277] sm:$0xf] %v328
        %v330 = vld [vmem:[%s284] sm:$0xf]
        %v331 = vadd.f32 %v330, %v326
        %332 = vst [vmem:[%s284] sm:$0xf] %v331
        %s333 = sand.u32 %s124, 1
        %s334 = scalar_lea.sflag [#allocation4], %s333
        %s335 = sand.u32 %s124, 1
        %s336 = smul.addr %s335, 4
        %s337 = scalar_lea.vmem [#allocation7], %s336
        %s338 = sand.u32 %s152, 1
        %s339 = scalar_lea.sflag [#allocation9], %s338
        %s340 = sand.u32 %s152, 1
        %s341 = smul.addr %s340, 4
        %s342 = scalar_lea.vmem [#allocation8], %s341
        // Predicated region
        $region41: #{tpu_custom_call.1} parent=27 // pred_check
          %p343 = pneg %p134
        $region42: #{tpu_custom_call.1} parent=27 // pred_check_branch
          %345 = sbr.rel (%p343) target = $region44
        $region43: #{tpu_custom_call.1} parent=27 // pred_region
          %s346 = sadd.s32 %s32, %s33
          %s348 = ssub.s32 64, 64
          %349 = vsyncadd %s334, %s348
          %s350 = smul.addr %s346, 64
          %s351 = scalar_lea.hbm %s2, %s350
          %s353 = sshll.u32 %s337, 4
          %s354 = int_to_ptr.vmem [resolvable:$true] %s353
          %356 = dma.vmem_to_hbm [thread:$0]  %s354, 64, %s351, %s334
        $region44: #{tpu_custom_call.1} parent=27 // pred_fallthru
          _
        // Predicated region
        $region45: #{tpu_custom_call.1} parent=27 // pred_check
          %p357 = pneg %p162
        $region46: #{tpu_custom_call.1} parent=27 // pred_check_branch
          %359 = sbr.rel (%p357) target = $region48
        $region47: #{tpu_custom_call.1} parent=27 // pred_region
          %s360 = sadd.s32 %s32, %s33
          %s362 = ssub.s32 64, 64
          %363 = vsyncadd %s339, %s362
          %s364 = smul.addr %s360, 64
          %s365 = scalar_lea.hbm %s3, %s364
          %s367 = sshll.u32 %s342, 4
          %s368 = int_to_ptr.vmem [resolvable:$true] %s367
          %370 = dma.vmem_to_hbm [thread:$0]  %s368, 64, %s365, %s339
        $region48: #{tpu_custom_call.1} parent=27 // pred_fallthru
          _
      $region28: #{tpu_custom_call.1} parent=5 // pred_fallthru
        _
      %p371 = scmp.le.s32.totalorder 2, %s22
      // Predicated region
      $region49: #{tpu_custom_call.1} parent=5 // pred_check
        %p372 = pneg %p371
      $region50: #{tpu_custom_call.1} parent=5 // pred_check_branch
        %374 = sbr.rel (%p372) target = $region52
      $region51: #{tpu_custom_call.1} parent=5 // pred_region
        %s375 = ssub.s32 %s22, 2
        // Predicated region
        $region53: #{tpu_custom_call.1} parent=51 // pred_check
          %p376 = pneg %p140
        $region54: #{tpu_custom_call.1} parent=51 // pred_check_branch
          %378 = sbr.rel (%p376) target = $region56
        $region55: #{tpu_custom_call.1} parent=51 // pred_region
          %s379 = sand.u32 %s125, 1
          %s380 = scalar_lea.sflag [#allocation4], %s379
          %s381 = sand.u32 %s125, 1
          %s382 = smul.addr %s381, 4
          %s383 = scalar_lea.vmem [#allocation7], %s382
          %384 = dma.done %s380, 64
        $region56: #{tpu_custom_call.1} parent=51 // pred_fallthru
          _
        // Predicated region
        $region57: #{tpu_custom_call.1} parent=51 // pred_check
          %p385 = pneg %p168
        $region58: #{tpu_custom_call.1} parent=51 // pred_check_branch
          %387 = sbr.rel (%p385) target = $region60
        $region59: #{tpu_custom_call.1} parent=51 // pred_region
          %s388 = sand.u32 %s153, 1
          %s389 = scalar_lea.sflag [#allocation9], %s388
          %s390 = sand.u32 %s153, 1
          %s391 = smul.addr %s390, 4
          %s392 = scalar_lea.vmem [#allocation8], %s391
          %393 = dma.done %s389, 64
        $region60: #{tpu_custom_call.1} parent=51 // pred_fallthru
          _
      $region52: #{tpu_custom_call.1} parent=5 // pred_fallthru
        _
    $region6: #{tpu_custom_call.1} parent=1 // loop_footer
      %s26 = sadd.s32 1, %s22
    $region7: #{tpu_custom_call.1} parent=1 // loop_footer_branch
      %21 = sbr.rel target = $region3
    $region8: #{tpu_custom_call.1} parent=1 // loop_exit
      _
    %394 = vsyncpa [#allocation3], 1
    %s395 = scalar_lea.sflag [#allocation3], 1
    %396 = vsyncpa %s395, 1
    %397 = vsyncpa [#allocation6], 1
    %s398 = scalar_lea.sflag [#allocation6], 1
    %399 = vsyncpa %s398, 1
    %400 = vsyncpa [#allocation4], 1
    %s401 = scalar_lea.sflag [#allocation4], 1
    %402 = vsyncpa %s401, 1
    %403 = vsyncpa [#allocation9], 1
    %s404 = scalar_lea.sflag [#allocation9], 1
    %405 = vsyncpa %s404, 1

</llo_original>
